<compile_context>
chip_gen: v6e
topology: v6e:2x2x1
jax: 0.10.0
libtpu: 0.0.40
codegen_flags: <defaults>
</compile_context>

<pallas_src>
import jax
import jax.numpy as jnp
from jax.experimental import pallas as pl
from jax.experimental.pallas import tpu as pltpu

NEG_BIG = jnp.float32(-1e30)  # padding-class bias -> exp() underflows to exactly 0


def mlp_softmax_kernel(x_ref, w1_ref, b1_ref, w2_ref, b2_ref, w3_ref, b3_ref,
                       o_ref):
    # in-kernel f32 -> bf16 cast of the x tile (hidden under the layer-1 matmul)
    x = x_ref[...].astype(jnp.bfloat16)
    # layer 1: (TB, 784) bf16 @ (784, 128) bf16 -> f32 acc, + f32 bias, ReLU
    h1 = jnp.dot(x, w1_ref[...],
                 preferred_element_type=jnp.float32) + b1_ref[...]
    h1 = jnp.maximum(h1, 0.0).astype(jnp.bfloat16)
    # layer 2: (TB, 128) @ (128, 128)  (H2 zero-padded 64 -> 128, lane-dense)
    h2 = jnp.dot(h1, w2_ref[...],
                 preferred_element_type=jnp.float32) + b2_ref[...]
    h2 = jnp.maximum(h2, 0.0).astype(jnp.bfloat16)
    # output layer: (TB, 128) @ (128, 128); class cols >= 10 carry a -1e30 bias
    logits = jnp.dot(h2, w3_ref[...],
                     preferred_element_type=jnp.float32) + b3_ref[...]
    # max-stabilized softmax; padded lanes contribute exp(-huge) == 0.
    # Exact divide (not approx reciprocal): rows sum to 1 within f32 precision.
    m = jnp.max(logits, axis=-1, keepdims=True)
    e = jnp.exp(logits - m)
    o_ref[...] = e / jnp.sum(e, axis=-1, keepdims=True)


def prepare_params(params):
    """One-time weight prep (call once at init, not per forward call).

    Casts weights to bf16, zero-pads the 64-wide hidden dim to 128 and the
    10-wide class dim to 128 (padded classes get a -1e30 bias so softmax
    assigns them exactly 0). Biases stay f32.
    """
    w1, b1, w2, b2, w3, b3 = params
    K, H1 = w1.shape            # 784, 128
    H2 = w2.shape[1]            # 64
    C = w3.shape[1]             # 10
    H2p, Cp = 128, 128

    w1b = w1.astype(jnp.bfloat16)                                        # (784, 128)
    w2p = jnp.zeros((H1, H2p), jnp.bfloat16).at[:, :H2].set(
        w2.astype(jnp.bfloat16))                                         # (128, 128)
    b2p = jnp.zeros((1, H2p), jnp.float32).at[:, :H2].set(b2)            # (1, 128)
    w3p = jnp.zeros((H2p, Cp), jnp.bfloat16).at[:H2, :C].set(
        w3.astype(jnp.bfloat16))                                         # (128, 128)
    b3p = jnp.full((1, Cp), NEG_BIG, jnp.float32).at[:, :C].set(b3)      # (1, 128)
    return (w1b, b1, w2p, b2p, w3p, b3p, C)


def _choose_tb(B):
    """Batch tile: multiple of 8, capped at 512; >= 8 grid steps for large B
    (>= 4 steps per TensorCore on v7x so the pipeliner can overlap x DMA)."""
    b8 = -(-B // 8) * 8
    if b8 <= 512:
        return b8                                  # one (or few) tiles
    return min(512, max(128, ((b8 // 8 + 127) // 128) * 128))


def network_forward(x, prepared, *, tb=None):
    """x: (B, 784) float32. prepared: output of prepare_params()."""
    w1b, b1, w2p, b2p, w3p, b3p, C = prepared
    B, K = x.shape
    H1 = w1b.shape[1]
    H2p = w2p.shape[1]
    Cp = w3p.shape[1]

    if tb is None:
        tb = _choose_tb(B)
    Bp = -(-B // tb) * tb
    xp = x if Bp == B else jnp.zeros((Bp, K), x.dtype).at[:B, :].set(x)

    def resident(shape):
        # weights/biases: same block every grid step -> stay resident in VMEM
        return pl.BlockSpec(shape, lambda i: (0, 0))

    out_padded = pl.pallas_call(
        mlp_softmax_kernel,
        out_shape=jax.ShapeDtypeStruct((Bp, Cp), jnp.float32),
        grid=(Bp // tb,),
        in_specs=[
            pl.BlockSpec((tb, K), lambda i: (i, 0)),    # x: f32, full K=784 (no pad)
            resident((K, H1)),                          # w1 bf16
            resident((1, H1)),                          # b1 f32
            resident((H1, H2p)),                        # w2 bf16 (padded to 128)
            resident((1, H2p)),                         # b2 f32  (padded to 128)
            resident((H2p, Cp)),                        # w3 bf16 (padded)
            resident((1, Cp)),                          # b3 f32  (padded, -1e30)
        ],
        out_specs=pl.BlockSpec((tb, Cp), lambda i: (i, 0)),
        compiler_params=pltpu.CompilerParams(
            dimension_semantics=("parallel",),          # shard batch tiles over TCs
            vmem_limit_bytes=32 * 1024 * 1024,          # per-step footprint << 32 MiB
        ),
    )(xp, w1b, b1, w2p, b2p, w3p, b3p)

    return out_padded[:B, :C]


def init_params(key):
    # PyTorch nn.Linear default init: U(-1/sqrt(fan_in), 1/sqrt(fan_in)),
    # weights stored transposed: (in_features, out_features).
    def linear(key, fan_in, fan_out):
        kw, kb = jax.random.split(key)
        bound = 1.0 / jnp.sqrt(fan_in)
        w = jax.random.uniform(kw, (fan_in, fan_out), jnp.float32,
                               minval=-bound, maxval=bound)
        b = jax.random.uniform(kb, (1, fan_out), jnp.float32,
                               minval=-bound, maxval=bound)
        return w, b

    k1, k2, k3 = jax.random.split(key, 3)
    w1, b1 = linear(k1, 784, 128)
    w2, b2 = linear(k2, 128, 64)
    w3, b3 = linear(k3, 64, 10)
    return (w1, b1, w2, b2, w3, b3)


if __name__ == "__main__":
    key = jax.random.PRNGKey(0)
    kx, kp = jax.random.split(key)
    B = 16                                   # small demo batch; tb=8 -> 2 grid steps
    x = jax.random.normal(kx, (B, 784), jnp.float32)
    params = init_params(kp)
    prepared = prepare_params(params)        # one-time weight prep (hoisted out of forward)

    out = jax.block_until_ready(network_forward(x, prepared, tb=8))

    # sanity: shape and softmax rows sum to ~1 (exact divide -> tight tolerance)
    assert out.shape == (B, 10)
    assert jnp.allclose(jnp.sum(out, axis=-1), 1.0, atol=1e-4)

    # cross-check against a plain-JAX reference on the same bf16 matmul path
    w1, b1, w2, b2, w3, b3 = params
    xb = x.astype(jnp.bfloat16)
    h = jnp.maximum(jnp.dot(xb, w1.astype(jnp.bfloat16),
                            preferred_element_type=jnp.float32) + b1, 0.0)
    h = jnp.maximum(jnp.dot(h.astype(jnp.bfloat16), w2.astype(jnp.bfloat16),
                            preferred_element_type=jnp.float32) + b2, 0.0)
    logits = jnp.dot(h.astype(jnp.bfloat16), w3.astype(jnp.bfloat16),
                     preferred_element_type=jnp.float32) + b3
    ref = jax.nn.softmax(logits, axis=-1)
    assert jnp.allclose(out, ref, atol=5e-3, rtol=5e-2)

    print("KERNEL_OK")
</pallas_src>

<mosaic_0001>
module attributes {stable_mosaic.version = 11 : i64} {
  func.func @mlp_softmax_kernel(%arg0: i32, %arg1: memref<8x784xf32, #tpu.memory_space<vmem>>, %arg2: memref<784x128xbf16, #tpu.memory_space<vmem>>, %arg3: memref<1x128xf32, #tpu.memory_space<vmem>>, %arg4: memref<128x128xbf16, #tpu.memory_space<vmem>>, %arg5: memref<1x128xf32, #tpu.memory_space<vmem>>, %arg6: memref<128x128xbf16, #tpu.memory_space<vmem>>, %arg7: memref<1x128xf32, #tpu.memory_space<vmem>>, %arg8: memref<8x128xf32, #tpu.memory_space<vmem>>) attributes {dimension_semantics = [#tpu.dimension_semantics<parallel>], iteration_bounds = array<i64: 2>, scalar_prefetch = 0 : i64, scratch_operands = 0 : i64, tpu.core_type = #tpu.core_type<tc>, window_params = [{transform_indices = @transform_0, window_bounds = array<i64: 8, 784>}, {pipeline_mode = #tpu.pipeline_mode<synchronous>, transform_indices = @transform_1, window_bounds = array<i64: 784, 128>}, {pipeline_mode = #tpu.pipeline_mode<synchronous>, transform_indices = @transform_2, window_bounds = array<i64: 1, 128>}, {pipeline_mode = #tpu.pipeline_mode<synchronous>, transform_indices = @transform_3, window_bounds = array<i64: 128, 128>}, {pipeline_mode = #tpu.pipeline_mode<synchronous>, transform_indices = @transform_4, window_bounds = array<i64: 1, 128>}, {pipeline_mode = #tpu.pipeline_mode<synchronous>, transform_indices = @transform_5, window_bounds = array<i64: 128, 128>}, {pipeline_mode = #tpu.pipeline_mode<synchronous>, transform_indices = @transform_6, window_bounds = array<i64: 1, 128>}, {transform_indices = @transform_7, window_bounds = array<i64: 8, 128>}]} {
    %c0 = arith.constant 0 : index
    %c0_0 = arith.constant 0 : index
    %0 = vector.load %arg1[%c0, %c0_0] : memref<8x784xf32, #tpu.memory_space<vmem>>, vector<8x784xf32>
    %1 = arith.truncf %0 : vector<8x784xf32> to vector<8x784xbf16>
    %c0_1 = arith.constant 0 : index
    %c0_2 = arith.constant 0 : index
    %2 = vector.load %arg2[%c0_1, %c0_2] : memref<784x128xbf16, #tpu.memory_space<vmem>>, vector<784x128xbf16>
    %cst = arith.constant dense<0.000000e+00> : vector<8x128xf32>
    %3 = tpu.matmul %1, %2, %cst {dimension_numbers = #tpu.dot_dimension_numbers<[1], [0], [0], [1], [0, 0, 1, 1], [], []>} : vector<8x784xbf16>, vector<784x128xbf16>, vector<8x128xf32> -> vector<8x128xf32>
    %c0_3 = arith.constant 0 : index
    %c0_4 = arith.constant 0 : index
    %4 = vector.load %arg3[%c0_3, %c0_4] : memref<1x128xf32, #tpu.memory_space<vmem>>, vector<1x128xf32>
    %5 = vector.broadcast %4 : vector<1x128xf32> to vector<8x128xf32>
    %6 = arith.addf %3, %5 : vector<8x128xf32>
    %cst_5 = arith.constant 0.000000e+00 : f32
    %7 = vector.broadcast %cst_5 : f32 to vector<8x128xf32>
    %8 = arith.maximumf %6, %7 : vector<8x128xf32>
    %9 = arith.truncf %8 : vector<8x128xf32> to vector<8x128xbf16>
    %c0_6 = arith.constant 0 : index
    %c0_7 = arith.constant 0 : index
    %10 = vector.load %arg4[%c0_6, %c0_7] : memref<128x128xbf16, #tpu.memory_space<vmem>>, vector<128x128xbf16>
    %cst_8 = arith.constant dense<0.000000e+00> : vector<8x128xf32>
    %11 = tpu.matmul %9, %10, %cst_8 {dimension_numbers = #tpu.dot_dimension_numbers<[1], [0], [0], [1], [0, 0, 1, 1], [], []>} : vector<8x128xbf16>, vector<128x128xbf16>, vector<8x128xf32> -> vector<8x128xf32>
    %c0_9 = arith.constant 0 : index
    %c0_10 = arith.constant 0 : index
    %12 = vector.load %arg5[%c0_9, %c0_10] : memref<1x128xf32, #tpu.memory_space<vmem>>, vector<1x128xf32>
    %13 = vector.broadcast %12 : vector<1x128xf32> to vector<8x128xf32>
    %14 = arith.addf %11, %13 : vector<8x128xf32>
    %cst_11 = arith.constant 0.000000e+00 : f32
    %15 = vector.broadcast %cst_11 : f32 to vector<8x128xf32>
    %16 = arith.maximumf %14, %15 : vector<8x128xf32>
    %17 = arith.truncf %16 : vector<8x128xf32> to vector<8x128xbf16>
    %c0_12 = arith.constant 0 : index
    %c0_13 = arith.constant 0 : index
    %18 = vector.load %arg6[%c0_12, %c0_13] : memref<128x128xbf16, #tpu.memory_space<vmem>>, vector<128x128xbf16>
    %cst_14 = arith.constant dense<0.000000e+00> : vector<8x128xf32>
    %19 = tpu.matmul %17, %18, %cst_14 {dimension_numbers = #tpu.dot_dimension_numbers<[1], [0], [0], [1], [0, 0, 1, 1], [], []>} : vector<8x128xbf16>, vector<128x128xbf16>, vector<8x128xf32> -> vector<8x128xf32>
    %c0_15 = arith.constant 0 : index
    %c0_16 = arith.constant 0 : index
    %20 = vector.load %arg7[%c0_15, %c0_16] : memref<1x128xf32, #tpu.memory_space<vmem>>, vector<1x128xf32>
    %21 = vector.broadcast %20 : vector<1x128xf32> to vector<8x128xf32>
    %22 = arith.addf %19, %21 : vector<8x128xf32>
    %cst_17 = arith.constant dense<0xFF800000> : vector<8xf32>
    %23 = vector.multi_reduction <maximumf>, %22, %cst_17 [1] : vector<8x128xf32> to vector<8xf32>
    %24 = vector.shape_cast %23 : vector<8xf32> to vector<8x1xf32>
    %25 = vector.broadcast %24 : vector<8x1xf32> to vector<8x128xf32>
    %26 = arith.subf %22, %25 : vector<8x128xf32>
    %27 = math.exp %26 : vector<8x128xf32>
    %cst_18 = arith.constant dense<0.000000e+00> : vector<8xf32>
    %28 = vector.multi_reduction <add>, %27, %cst_18 [1] : vector<8x128xf32> to vector<8xf32>
    %29 = vector.shape_cast %28 : vector<8xf32> to vector<8x1xf32>
    %30 = vector.broadcast %29 : vector<8x1xf32> to vector<8x128xf32>
    %31 = arith.divf %27, %30 : vector<8x128xf32>
    %c0_19 = arith.constant 0 : index
    %c0_20 = arith.constant 0 : index
    %32 = vector.load %arg8[%c0_19, %c0_20] : memref<8x128xf32, #tpu.memory_space<vmem>>, vector<8x128xf32>
    tpu.vector_store %arg8[%c0_19, %c0_20], %31 {strides = array<i32>} : memref<8x128xf32, #tpu.memory_space<vmem>>, vector<8x128xf32>,
    return
  }
  func.func @transform_0(%arg0: i32) -> (i32, i32) {
    %c0_i32 = arith.constant 0 : i32
    %c0_i32_0 = arith.constant 0 : i32
    return %arg0, %c0_i32 : i32, i32
  }
  func.func @transform_1(%arg0: i32) -> (i32, i32) {
    %c0_i32 = arith.constant 0 : i32
    %c0_i32_0 = arith.constant 0 : i32
    %c0_i32_1 = arith.constant 0 : i32
    return %c0_i32, %c0_i32_0 : i32, i32
  }
  func.func @transform_2(%arg0: i32) -> (i32, i32) {
    %c0_i32 = arith.constant 0 : i32
    %c0_i32_0 = arith.constant 0 : i32
    %c0_i32_1 = arith.constant 0 : i32
    return %c0_i32, %c0_i32_0 : i32, i32
  }
  func.func @transform_3(%arg0: i32) -> (i32, i32) {
    %c0_i32 = arith.constant 0 : i32
    %c0_i32_0 = arith.constant 0 : i32
    %c0_i32_1 = arith.constant 0 : i32
    return %c0_i32, %c0_i32_0 : i32, i32
  }
  func.func @transform_4(%arg0: i32) -> (i32, i32) {
    %c0_i32 = arith.constant 0 : i32
    %c0_i32_0 = arith.constant 0 : i32
    %c0_i32_1 = arith.constant 0 : i32
    return %c0_i32, %c0_i32_0 : i32, i32
  }
  func.func @transform_5(%arg0: i32) -> (i32, i32) {
    %c0_i32 = arith.constant 0 : i32
    %c0_i32_0 = arith.constant 0 : i32
    %c0_i32_1 = arith.constant 0 : i32
    return %c0_i32, %c0_i32_0 : i32, i32
  }
  func.func @transform_6(%arg0: i32) -> (i32, i32) {
    %c0_i32 = arith.constant 0 : i32
    %c0_i32_0 = arith.constant 0 : i32
    %c0_i32_1 = arith.constant 0 : i32
    return %c0_i32, %c0_i32_0 : i32, i32
  }
  func.func @transform_7(%arg0: i32) -> (i32, i32) {
    %c0_i32 = arith.constant 0 : i32
    %c0_i32_0 = arith.constant 0 : i32
    return %arg0, %c0_i32 : i32, i32
  }
}

</mosaic_0001>

<llo_original>
// kernel: tpu_custom_call.1
$region0: #{tpu_custom_call.1}
  #allocation0 [shape = 'u32[]', space=smem, size = 0x4, offset = 0x4, fixed_abs, tag = 'smem constant byte address 0x4 - core index']
  #allocation1 [shape = 'u32[144,128]{1,0:T(1,128)}', space=vmem, size = 0x12000, scoped, tag = 'internal scratch']
  %s0 = inlined_call_operand.hbm [shape: f32[16,784], index: 0, kind: input, shape index: {}]
  %s1 = inlined_call_operand.hbm [shape: bf16[784,128], index: 1, kind: input, shape index: {}]
  %s2 = inlined_call_operand.vmem [shape: f32[1,128], index: 2, kind: input, shape index: {}]
  %s3 = inlined_call_operand.hbm [shape: bf16[128,128], index: 3, kind: input, shape index: {}]
  %s4 = inlined_call_operand.vmem [shape: f32[1,128], index: 4, kind: input, shape index: {}]
  %s5 = inlined_call_operand.hbm [shape: bf16[128,128], index: 5, kind: input, shape index: {}]
  %s6 = inlined_call_operand.vmem [shape: f32[1,128], index: 6, kind: input, shape index: {}]
  %s7 = inlined_call_operand.hbm [shape: f32[16,128], index: 7, kind: output, shape index: {}]
  %s8 = sld [smem:[#allocation0]]
  $region77: #{tpu_custom_call.1} parent=0
    _
  %s10 = ssub.s32 1, %s8
  %s11 = scalar_select 0, %s10, %s8
  $region1: #{tpu_custom_call.1} parent=0
    #allocation2 [shape = 'u8[57344]{0}', space=vmem, size = 0xe000, scoped, tag = 'input window, operand 0']
    #allocation3 [shape = 's32[2]{0}', space=sflag, size = 0x8, scoped, tag = 'scoped memory for tpu_custom_call.1']
    #allocation4 [shape = 's32[2]{0}', space=sflag, size = 0x8, scoped, tag = 'scoped memory for tpu_custom_call.1']
    #allocation5 [shape = 'u8[200704]{0}', space=vmem, size = 0x31000, scoped, tag = 'input window, operand 1, single buffered']
    #allocation6 [shape = 's32[1]{0}', space=sflag, size = 0x4, scoped, tag = 'scoped memory for tpu_custom_call.1']
    #allocation7 [shape = 'u8[32768]{0}', space=vmem, size = 0x8000, scoped, tag = 'input window, operand 3, single buffered']
    #allocation8 [shape = 'u8[32768]{0}', space=vmem, size = 0x8000, scoped, tag = 'input window, operand 5, single buffered']
    #allocation9 [shape = 's32[1]{0}', space=sflag, size = 0x4, scoped, tag = 'scoped memory for tpu_custom_call.1']
    #allocation10 [shape = 'u8[8192]{0}', space=vmem, size = 0x2000, scoped, tag = 'output window, operand 0']
    %12 = vsyncpa [#allocation3], 0
    %s13 = scalar_lea.sflag [#allocation3], 1
    %14 = vsyncpa %s13, 0
    %15 = vsyncpa [#allocation6], 0
    %16 = vsyncpa [#allocation9], 0
    %17 = vsyncpa [#allocation4], 0
    %s18 = scalar_lea.sflag [#allocation4], 1
    %19 = vsyncpa %s18, 0
    loop: start=0, step=1, limit=4
    $region2: #{tpu_custom_call.1} parent=1 // loop_pre_header
      _
    $region3: #{tpu_custom_call.1} parent=1 // loop_header
      %s21 = sphi 0, %s25
      %p22 = scmp.ge.s32.totalorder %s21, 4
      %s31 = sphi 0, %s33
      %s34 = sphi 0, %s31
      %s35 = sphi 0, %s34
      %s51 = sphi 0, %s35
      %s55 = sphi 0, %s55
      %s57 = sphi 0, %s55
      %s58 = sphi 0, %s57
      %s72 = sphi 0, %s58
      %s76 = sphi 0, %s76
      %s78 = sphi 0, %s76
      %s79 = sphi 0, %s78
      %s93 = sphi 0, %s79
      %s97 = sphi 0, %s97
      %s99 = sphi 0, %s97
      %s100 = sphi 0, %s99
      %s114 = sphi 0, %s100
      %s118 = sphi 0, %s118
      %s120 = sphi 0, %s118
      %s121 = sphi 0, %s120
      %s135 = sphi 0, %s121
      %s139 = sphi 0, %s139
      %s141 = sphi 0, %s139
      %s142 = sphi 0, %s141
      %s156 = sphi 0, %s142
      %s160 = sphi 0, %s160
      %s162 = sphi 0, %s160
      %s163 = sphi 0, %s162
      %s177 = sphi 0, %s163
      %s183 = sphi 0, %s185
      %s186 = sphi 0, %s183
      %s187 = sphi 0, %s186
      %s203 = sphi 0, %s187
    $region4: #{tpu_custom_call.1} parent=1 // loop_header_branch
      %24 = sbr.rel (%p22) target = $region8
    $region5: #{tpu_custom_call.1} parent=1 // loop_body
      %s26 = ssub.s32 %s21, 1
      %s27 = ssub.s32 %s21, 2
      %s28 = sadd.s32 %s21, 1
      %s29 = ssub.s32 %s21, %s28
      %p30 = scmp.eq.s32.totalorder %s29, 0
      %s32 = sadd.s32 %s31, 1
      %s33 = scalar_select %p30, %s31, %s32
      %p36 = pneg %p30
      %p37 = scmp.eq.s32.totalorder %s21, 1
      %p38 = por %p36, %p37
      %p39 = scmp.ne.s32.totalorder %s31, %s34
      %p40 = scmp.eq.s32.totalorder %s21, 0
      %p41 = por %p39, %p40
      %p42 = scmp.ne.s32.totalorder %s31, %s34
      %p43 = scmp.eq.s32.totalorder %s26, 1
      %p44 = por %p42, %p43
      %p45 = scmp.ne.s32.totalorder %s34, %s35
      %p46 = scmp.eq.s32.totalorder %s26, 0
      %p47 = por %p45, %p46
      %p48 = scmp.ne.s32.totalorder %s34, %s35
      %p49 = scmp.eq.s32.totalorder %s27, 1
      %p50 = por %p48, %p49
      %p52 = scmp.ne.s32.totalorder %s35, %s51
      %p53 = scmp.eq.s32.totalorder %s27, 0
      %p54 = por %p52, %p53
      %s56 = sadd.s32 %s55, 1
      %p59 = scmp.eq.s32.totalorder %s21, 1
      %p60 = scmp.ne.s32.totalorder %s55, %s57
      %p61 = scmp.eq.s32.totalorder %s21, 0
      %p62 = por %p60, %p61
      %p63 = scmp.ne.s32.totalorder %s55, %s57
      %p64 = scmp.eq.s32.totalorder %s26, 1
      %p65 = por %p63, %p64
      %p66 = scmp.ne.s32.totalorder %s57, %s58
      %p67 = scmp.eq.s32.totalorder %s26, 0
      %p68 = por %p66, %p67
      %p69 = scmp.ne.s32.totalorder %s57, %s58
      %p70 = scmp.eq.s32.totalorder %s27, 1
      %p71 = por %p69, %p70
      %p73 = scmp.ne.s32.totalorder %s58, %s72
      %p74 = scmp.eq.s32.totalorder %s27, 0
      %p75 = por %p73, %p74
      %s77 = sadd.s32 %s76, 1
      %p80 = scmp.eq.s32.totalorder %s21, 1
      %p81 = scmp.ne.s32.totalorder %s76, %s78
      %p82 = scmp.eq.s32.totalorder %s21, 0
      %p83 = por %p81, %p82
      %p84 = scmp.ne.s32.totalorder %s76, %s78
      %p85 = scmp.eq.s32.totalorder %s26, 1
      %p86 = por %p84, %p85
      %p87 = scmp.ne.s32.totalorder %s78, %s79
      %p88 = scmp.eq.s32.totalorder %s26, 0
      %p89 = por %p87, %p88
      %p90 = scmp.ne.s32.totalorder %s78, %s79
      %p91 = scmp.eq.s32.totalorder %s27, 1
      %p92 = por %p90, %p91
      %p94 = scmp.ne.s32.totalorder %s79, %s93
      %p95 = scmp.eq.s32.totalorder %s27, 0
      %p96 = por %p94, %p95
      %s98 = sadd.s32 %s97, 1
      %p101 = scmp.eq.s32.totalorder %s21, 1
      %p102 = scmp.ne.s32.totalorder %s97, %s99
      %p103 = scmp.eq.s32.totalorder %s21, 0
      %p104 = por %p102, %p103
      %p105 = scmp.ne.s32.totalorder %s97, %s99
      %p106 = scmp.eq.s32.totalorder %s26, 1
      %p107 = por %p105, %p106
      %p108 = scmp.ne.s32.totalorder %s99, %s100
      %p109 = scmp.eq.s32.totalorder %s26, 0
      %p110 = por %p108, %p109
      %p111 = scmp.ne.s32.totalorder %s99, %s100
      %p112 = scmp.eq.s32.totalorder %s27, 1
      %p113 = por %p111, %p112
      %p115 = scmp.ne.s32.totalorder %s100, %s114
      %p116 = scmp.eq.s32.totalorder %s27, 0
      %p117 = por %p115, %p116
      %s119 = sadd.s32 %s118, 1
      %p122 = scmp.eq.s32.totalorder %s21, 1
      %p123 = scmp.ne.s32.totalorder %s118, %s120
      %p124 = scmp.eq.s32.totalorder %s21, 0
      %p125 = por %p123, %p124
      %p126 = scmp.ne.s32.totalorder %s118, %s120
      %p127 = scmp.eq.s32.totalorder %s26, 1
      %p128 = por %p126, %p127
      %p129 = scmp.ne.s32.totalorder %s120, %s121
      %p130 = scmp.eq.s32.totalorder %s26, 0
      %p131 = por %p129, %p130
      %p132 = scmp.ne.s32.totalorder %s120, %s121
      %p133 = scmp.eq.s32.totalorder %s27, 1
      %p134 = por %p132, %p133
      %p136 = scmp.ne.s32.totalorder %s121, %s135
      %p137 = scmp.eq.s32.totalorder %s27, 0
      %p138 = por %p136, %p137
      %s140 = sadd.s32 %s139, 1
      %p143 = scmp.eq.s32.totalorder %s21, 1
      %p144 = scmp.ne.s32.totalorder %s139, %s141
      %p145 = scmp.eq.s32.totalorder %s21, 0
      %p146 = por %p144, %p145
      %p147 = scmp.ne.s32.totalorder %s139, %s141
      %p148 = scmp.eq.s32.totalorder %s26, 1
      %p149 = por %p147, %p148
      %p150 = scmp.ne.s32.totalorder %s141, %s142
      %p151 = scmp.eq.s32.totalorder %s26, 0
      %p152 = por %p150, %p151
      %p153 = scmp.ne.s32.totalorder %s141, %s142
      %p154 = scmp.eq.s32.totalorder %s27, 1
      %p155 = por %p153, %p154
      %p157 = scmp.ne.s32.totalorder %s142, %s156
      %p158 = scmp.eq.s32.totalorder %s27, 0
      %p159 = por %p157, %p158
      %s161 = sadd.s32 %s160, 1
      %p164 = scmp.eq.s32.totalorder %s21, 1
      %p165 = scmp.ne.s32.totalorder %s160, %s162
      %p166 = scmp.eq.s32.totalorder %s21, 0
      %p167 = por %p165, %p166
      %p168 = scmp.ne.s32.totalorder %s160, %s162
      %p169 = scmp.eq.s32.totalorder %s26, 1
      %p170 = por %p168, %p169
      %p171 = scmp.ne.s32.totalorder %s162, %s163
      %p172 = scmp.eq.s32.totalorder %s26, 0
      %p173 = por %p171, %p172
      %p174 = scmp.ne.s32.totalorder %s162, %s163
      %p175 = scmp.eq.s32.totalorder %s27, 1
      %p176 = por %p174, %p175
      %p178 = scmp.ne.s32.totalorder %s163, %s177
      %p179 = scmp.eq.s32.totalorder %s27, 0
      %p180 = por %p178, %p179
      %s181 = ssub.s32 %s21, %s28
      %p182 = scmp.eq.s32.totalorder %s181, 0
      %s184 = sadd.s32 %s183, 1
      %s185 = scalar_select %p182, %s183, %s184
      %p188 = pneg %p182
      %p189 = scmp.eq.s32.totalorder %s21, 1
      %p190 = por %p188, %p189
      %p191 = scmp.ne.s32.totalorder %s183, %s186
      %p192 = scmp.eq.s32.totalorder %s21, 0
      %p193 = por %p191, %p192
      %p194 = scmp.ne.s32.totalorder %s183, %s186
      %p195 = scmp.eq.s32.totalorder %s26, 1
      %p196 = por %p194, %p195
      %p197 = scmp.ne.s32.totalorder %s186, %s187
      %p198 = scmp.eq.s32.totalorder %s26, 0
      %p199 = por %p197, %p198
      %p200 = scmp.ne.s32.totalorder %s186, %s187
      %p201 = scmp.eq.s32.totalorder %s27, 1
      %p202 = por %p200, %p201
      %p204 = scmp.ne.s32.totalorder %s187, %s203
      %p205 = scmp.eq.s32.totalorder %s27, 0
      %p206 = por %p204, %p205
      %p207 = scmp.le.s32.totalorder 1, %s21
      %p208 = scmp.lt.s32.totalorder %s21, 3
      %p209 = pnand %p207, %p208
      %p210 = pneg %p209
      // Predicated region
      $region9: #{tpu_custom_call.1} parent=5 // pred_check
        _
      $region10: #{tpu_custom_call.1} parent=5 // pred_check_branch
        %212 = sbr.rel (%p209) target = $region12
      $region11: #{tpu_custom_call.1} parent=5 // pred_region
        %s213 = ssub.s32 %s21, 1
        // Predicated region
        $region13: #{tpu_custom_call.1} parent=11 // pred_check
          %p214 = pneg %p68
        $region14: #{tpu_custom_call.1} parent=11 // pred_check_branch
          %216 = sbr.rel (%p214) target = $region16
        $region15: #{tpu_custom_call.1} parent=11 // pred_region
          %s218 = ssub.s32 6272, 6272
          %219 = vsyncadd [#allocation6], %s218
          %s220 = sshll.u32 [#allocation5], 4
          %s221 = int_to_ptr.vmem [resolvable:$true] %s220
          %226 = dma.hbm_to_vmem [thread:$0]  %s1, 6272, %s221, [#allocation6], 64, 64, 4
        $region16: #{tpu_custom_call.1} parent=11 // pred_fallthru
          _
        // Predicated region
        $region17: #{tpu_custom_call.1} parent=11 // pred_check
          %p227 = pneg %p89
        $region18: #{tpu_custom_call.1} parent=11 // pred_check_branch
          %229 = sbr.rel (%p227) target = $region20
        $region19: #{tpu_custom_call.1} parent=11 // pred_region
          _
        $region20: #{tpu_custom_call.1} parent=11 // pred_fallthru
          _
        // Predicated region
        $region21: #{tpu_custom_call.1} parent=11 // pred_check
          %p230 = pneg %p110
        $region22: #{tpu_custom_call.1} parent=11 // pred_check_branch
          %232 = sbr.rel (%p230) target = $region24
        $region23: #{tpu_custom_call.1} parent=11 // pred_region
          %s234 = ssub.s32 1024, 1024
          %235 = vsyncadd [#allocation6], %s234
          %s236 = sshll.u32 [#allocation7], 4
          %s237 = int_to_ptr.vmem [resolvable:$true] %s236
          %242 = dma.hbm_to_vmem [thread:$0]  %s3, 1024, %s237, [#allocation6], 64, 64, 4
        $region24: #{tpu_custom_call.1} parent=11 // pred_fallthru
          _
        // Predicated region
        $region25: #{tpu_custom_call.1} parent=11 // pred_check
          %p243 = pneg %p131
        $region26: #{tpu_custom_call.1} parent=11 // pred_check_branch
          %245 = sbr.rel (%p243) target = $region28
        $region27: #{tpu_custom_call.1} parent=11 // pred_region
          _
        $region28: #{tpu_custom_call.1} parent=11 // pred_fallthru
          _
        // Predicated region
        $region29: #{tpu_custom_call.1} parent=11 // pred_check
          %p246 = pneg %p152
        $region30: #{tpu_custom_call.1} parent=11 // pred_check_branch
          %248 = sbr.rel (%p246) target = $region32
        $region31: #{tpu_custom_call.1} parent=11 // pred_region
          %s250 = ssub.s32 1024, 1024
          %251 = vsyncadd [#allocation9], %s250
          %s252 = sshll.u32 [#allocation8], 4
          %s253 = int_to_ptr.vmem [resolvable:$true] %s252
          %258 = dma.hbm_to_vmem [thread:$0]  %s5, 1024, %s253, [#allocation9], 64, 64, 4
        $region32: #{tpu_custom_call.1} parent=11 // pred_fallthru
          _
        // Predicated region
        $region33: #{tpu_custom_call.1} parent=11 // pred_check
          %p259 = pneg %p173
        $region34: #{tpu_custom_call.1} parent=11 // pred_check_branch
          %261 = sbr.rel (%p259) target = $region36
        $region35: #{tpu_custom_call.1} parent=11 // pred_region
          _
        $region36: #{tpu_custom_call.1} parent=11 // pred_fallthru
          _
      $region12: #{tpu_custom_call.1} parent=5 // pred_fallthru
        _
      %p262 = scmp.lt.s32.totalorder %s21, 2
      // Predicated region
      $region37: #{tpu_custom_call.1} parent=5 // pred_check
        %p263 = pneg %p262
      $region38: #{tpu_custom_call.1} parent=5 // pred_check_branch
        %265 = sbr.rel (%p263) target = $region40
      $region39: #{tpu_custom_call.1} parent=5 // pred_region
        // Predicated region
        $region41: #{tpu_custom_call.1} parent=39 // pred_check
          %p266 = pneg %p41
        $region42: #{tpu_custom_call.1} parent=39 // pred_check_branch
          %268 = sbr.rel (%p266) target = $region44
        $region43: #{tpu_custom_call.1} parent=39 // pred_region
          %s269 = sand.u32 %s31, 1
          %s270 = scalar_lea.sflag [#allocation3], %s269
          %s271 = sand.u32 %s31, 1
          %s272 = smul.addr %s271, 56
          %s273 = scalar_lea.vmem [#allocation2], %s272
          %s275 = ssub.s32 896, 896
          %276 = vsyncadd %s270, %s275
          %s277 = smul.addr %s21, 7
          %s278 = smul.addr %s277, 128
          %s279 = scalar_lea.hbm %s0, %s278
          %s281 = sshll.u32 %s273, 4
          %s282 = int_to_ptr.vmem [resolvable:$true] %s281
          %284 = dma.hbm_to_vmem [thread:$0]  %s279, 896, %s282, %s270
        $region44: #{tpu_custom_call.1} parent=39 // pred_fallthru
          _
      $region40: #{tpu_custom_call.1} parent=5 // pred_fallthru
        _
      %p285 = scmp.le.s32.totalorder 1, %s21
      %p286 = scmp.lt.s32.totalorder %s21, 3
      %p287 = pnand %p285, %p286
      %p288 = pneg %p287
      // Predicated region
      $region45: #{tpu_custom_call.1} parent=5 // pred_check
        _
      $region46: #{tpu_custom_call.1} parent=5 // pred_check_branch
        %290 = sbr.rel (%p287) target = $region48
      $region47: #{tpu_custom_call.1} parent=5 // pred_region
        %s291 = ssub.s32 %s21, 1
        %s292 = sand.u32 %s34, 1
        %s293 = scalar_lea.sflag [#allocation3], %s292
        %s294 = sand.u32 %s34, 1
        %s295 = smul.addr %s294, 56
        %s296 = scalar_lea.vmem [#allocation2], %s295
        // Predicated region
        $region49: #{tpu_custom_call.1} parent=47 // pred_check
          %p297 = pneg %p47
        $region50: #{tpu_custom_call.1} parent=47 // pred_check_branch
          %299 = sbr.rel (%p297) target = $region52
        $region51: #{tpu_custom_call.1} parent=47 // pred_region
          %300 = dma.done %s293, 896
        $region52: #{tpu_custom_call.1} parent=47 // pred_fallthru
          _
        // Predicated region
        $region53: #{tpu_custom_call.1} parent=47 // pred_check
          %p301 = pneg %p68
        $region54: #{tpu_custom_call.1} parent=47 // pred_check_branch
          %303 = sbr.rel (%p301) target = $region56
        $region55: #{tpu_custom_call.1} parent=47 // pred_region
          %304 = dma.done [#allocation6], 6272
        $region56: #{tpu_custom_call.1} parent=47 // pred_fallthru
          _
        // Predicated region
        $region57: #{tpu_custom_call.1} parent=47 // pred_check
          %p305 = pneg %p110
        $region58: #{tpu_custom_call.1} parent=47 // pred_check_branch
          %307 = sbr.rel (%p305) target = $region60
        $region59: #{tpu_custom_call.1} parent=47 // pred_region
          %308 = dma.done [#allocation6], 1024
        $region60: #{tpu_custom_call.1} parent=47 // pred_fallthru
          _
        // Predicated region
        $region61: #{tpu_custom_call.1} parent=47 // pred_check
          %p309 = pneg %p152
        $region62: #{tpu_custom_call.1} parent=47 // pred_check_branch
          %311 = sbr.rel (%p309) target = $region64
        $region63: #{tpu_custom_call.1} parent=47 // pred_region
          %312 = dma.done [#allocation9], 1024
        $region64: #{tpu_custom_call.1} parent=47 // pred_fallthru
          _
        %s313 = sand.u32 %s34, 1
        %s314 = scalar_lea.sflag [#allocation3], %s313
        %s315 = sand.u32 %s34, 1
        %s316 = smul.addr %s315, 56
        %s317 = scalar_lea.vmem [#allocation2], %s316
        %p318 = pneg %p47
        %p319 = pneg %p44
        %p320 = pneg %p68
        %p321 = pneg %p65
        %p322 = pneg %p89
        %p323 = pneg %p86
        %p324 = pneg %p110
        %p325 = pneg %p107
        %p326 = pneg %p131
        %p327 = pneg %p128
        %p328 = pneg %p152
        %p329 = pneg %p149
        %p330 = pneg %p173
        %p331 = pneg %p170
        %p332 = pneg %p199
        %p333 = pneg %p196
        %s334 = sand.u32 %s186, 1
        %s335 = scalar_lea.sflag [#allocation4], %s334
        %s336 = sand.u32 %s186, 1
        %s337 = smul.addr %s336, 8
        %s338 = scalar_lea.vmem [#allocation10], %s337
        %v340 = vld [vmem:[%s296] sm:$0xff]
        %v341 = vld [vmem:[%s296 + $0x8] sm:$0xff]
        %v342 = vld [vmem:[%s296 + $0x10] sm:$0xff]
        %v343 = vld [vmem:[%s296 + $0x18] sm:$0xff]
        %v344 = vld [vmem:[%s296 + $0x20] sm:$0xff]
        %v345 = vld [vmem:[%s296 + $0x28] sm:$0xff]
        %v346 = vld [vmem:[%s296 + $0x30] sm:$0xff]
        %v347 = vpack.c.bf16 %v340, %v340
        %v348 = vpack.c.bf16 %v341, %v341
        %v349 = vpack.c.bf16 %v342, %v342
        %v350 = vpack.c.bf16 %v343, %v343
        %v351 = vpack.c.bf16 %v344, %v344
        %v352 = vpack.c.bf16 %v345, %v345
        %v353 = vpack.c.bf16 %v346, %v346
        %v354 = vld [vmem:[#allocation5] sm:$0xf]
        %v355 = vld [vmem:[#allocation5 + $0x4] sm:$0xf]
        %v356 = vld [vmem:[#allocation5 + $0x8] sm:$0xf]
        %v357 = vld [vmem:[#allocation5 + $0xc] sm:$0xf]
        %v358 = vld [vmem:[#allocation5 + $0x10] sm:$0xf]
        %v359 = vld [vmem:[#allocation5 + $0x14] sm:$0xf]
        %v360 = vld [vmem:[#allocation5 + $0x18] sm:$0xf]
        %v361 = vld [vmem:[#allocation5 + $0x1c] sm:$0xf]
        %v362 = vld [vmem:[#allocation5 + $0x20] sm:$0xf]
        %v363 = vld [vmem:[#allocation5 + $0x24] sm:$0xf]
        %v364 = vld [vmem:[#allocation5 + $0x28] sm:$0xf]
        %v365 = vld [vmem:[#allocation5 + $0x2c] sm:$0xf]
        %v366 = vld [vmem:[#allocation5 + $0x30] sm:$0xf]
        %v367 = vld [vmem:[#allocation5 + $0x34] sm:$0xf]
        %v368 = vld [vmem:[#allocation5 + $0x38] sm:$0xf]
        %v369 = vld [vmem:[#allocation5 + $0x3c] sm:$0xf]
        %v370 = vld [vmem:[#allocation5 + $0x40] sm:$0xf]
        %v371 = vld [vmem:[#allocation5 + $0x44] sm:$0xf]
        %v372 = vld [vmem:[#allocation5 + $0x48] sm:$0xf]
        %v373 = vld [vmem:[#allocation5 + $0x4c] sm:$0xf]
        %v374 = vld [vmem:[#allocation5 + $0x50] sm:$0xf]
        %v375 = vld [vmem:[#allocation5 + $0x54] sm:$0xf]
        %v376 = vld [vmem:[#allocation5 + $0x58] sm:$0xf]
        %v377 = vld [vmem:[#allocation5 + $0x5c] sm:$0xf]
        %v378 = vld [vmem:[#allocation5 + $0x60] sm:$0xf]
        %v379 = vld [vmem:[#allocation5 + $0x64] sm:$0xf]
        %v380 = vld [vmem:[#allocation5 + $0x68] sm:$0xf]
        %v381 = vld [vmem:[#allocation5 + $0x6c] sm:$0xf]
        %v382 = vld [vmem:[#allocation5 + $0x70] sm:$0xf]
        %v383 = vld [vmem:[#allocation5 + $0x74] sm:$0xf]
        %v384 = vld [vmem:[#allocation5 + $0x78] sm:$0xf]
        %v385 = vld [vmem:[#allocation5 + $0x7c] sm:$0xf]
        %v386 = vld [vmem:[#allocation5 + $0x80] sm:$0xf]
        %v387 = vld [vmem:[#allocation5 + $0x84] sm:$0xf]
        %v388 = vld [vmem:[#allocation5 + $0x88] sm:$0xf]
        %v389 = vld [vmem:[#allocation5 + $0x8c] sm:$0xf]
        %v390 = vld [vmem:[#allocation5 + $0x90] sm:$0xf]
        %v391 = vld [vmem:[#allocation5 + $0x94] sm:$0xf]
        %v392 = vld [vmem:[#allocation5 + $0x98] sm:$0xf]
        %v393 = vld [vmem:[#allocation5 + $0x9c] sm:$0xf]
        %v394 = vld [vmem:[#allocation5 + $0xa0] sm:$0xf]
        %v395 = vld [vmem:[#allocation5 + $0xa4] sm:$0xf]
        %v396 = vld [vmem:[#allocation5 + $0xa8] sm:$0xf]
        %v397 = vld [vmem:[#allocation5 + $0xac] sm:$0xf]
        %v398 = vld [vmem:[#allocation5 + $0xb0] sm:$0xf]
        %v399 = vld [vmem:[#allocation5 + $0xb4] sm:$0xf]
        %v400 = vld [vmem:[#allocation5 + $0xb8] sm:$0xf]
        %v401 = vld [vmem:[#allocation5 + $0xbc] sm:$0xf]
        %v402 = vld [vmem:[#allocation5 + $0xc0] sm:$0xf]
        %v403 = vld [vmem:[#allocation5 + $0xc4] sm:$0xf]
        %v404 = vld [vmem:[#allocation5 + $0xc8] sm:$0xf]
        %v405 = vld [vmem:[#allocation5 + $0xcc] sm:$0xf]
        %v406 = vld [vmem:[#allocation5 + $0xd0] sm:$0xf]
        %v407 = vld [vmem:[#allocation5 + $0xd4] sm:$0xf]
        %v408 = vld [vmem:[#allocation5 + $0xd8] sm:$0xf]
        %v409 = vld [vmem:[#allocation5 + $0xdc] sm:$0xf]
        %v410 = vld [vmem:[#allocation5 + $0xe0] sm:$0xf]
        %v411 = vld [vmem:[#allocation5 + $0xe4] sm:$0xf]
        %v412 = vld [vmem:[#allocation5 + $0xe8] sm:$0xf]
        %v413 = vld [vmem:[#allocation5 + $0xec] sm:$0xf]
        %v414 = vld [vmem:[#allocation5 + $0xf0] sm:$0xf]
        %v415 = vld [vmem:[#allocation5 + $0xf4] sm:$0xf]
        %v416 = vld [vmem:[#allocation5 + $0xf8] sm:$0xf]
        %v417 = vld [vmem:[#allocation5 + $0xfc] sm:$0xf]
        %v418 = vld [vmem:[#allocation5 + $0x100] sm:$0xf]
        %v419 = vld [vmem:[#allocation5 + $0x104] sm:$0xf]
        %v420 = vld [vmem:[#allocation5 + $0x108] sm:$0xf]
        %v421 = vld [vmem:[#allocation5 + $0x10c] sm:$0xf]
        %v422 = vld [vmem:[#allocation5 + $0x110] sm:$0xf]
        %v423 = vld [vmem:[#allocation5 + $0x114] sm:$0xf]
        %v424 = vld [vmem:[#allocation5 + $0x118] sm:$0xf]
        %v425 = vld [vmem:[#allocation5 + $0x11c] sm:$0xf]
        %v426 = vld [vmem:[#allocation5 + $0x120] sm:$0xf]
        %v427 = vld [vmem:[#allocation5 + $0x124] sm:$0xf]
        %v428 = vld [vmem:[#allocation5 + $0x128] sm:$0xf]
        %v429 = vld [vmem:[#allocation5 + $0x12c] sm:$0xf]
        %v430 = vld [vmem:[#allocation5 + $0x130] sm:$0xf]
        %v431 = vld [vmem:[#allocation5 + $0x134] sm:$0xf]
        %v432 = vld [vmem:[#allocation5 + $0x138] sm:$0xf]
        %v433 = vld [vmem:[#allocation5 + $0x13c] sm:$0xf]
        %v434 = vld [vmem:[#allocation5 + $0x140] sm:$0xf]
        %v435 = vld [vmem:[#allocation5 + $0x144] sm:$0xf]
        %v436 = vld [vmem:[#allocation5 + $0x148] sm:$0xf]
        %v437 = vld [vmem:[#allocation5 + $0x14c] sm:$0xf]
        %v438 = vld [vmem:[#allocation5 + $0x150] sm:$0xf]
        %v439 = vld [vmem:[#allocation5 + $0x154] sm:$0xf]
        %v440 = vld [vmem:[#allocation5 + $0x158] sm:$0xf]
        %v441 = vld [vmem:[#allocation5 + $0x15c] sm:$0xf]
        %v442 = vld [vmem:[#allocation5 + $0x160] sm:$0xf]
        %v443 = vld [vmem:[#allocation5 + $0x164] sm:$0xf]
        %v444 = vld [vmem:[#allocation5 + $0x168] sm:$0xf]
        %v445 = vld [vmem:[#allocation5 + $0x16c] sm:$0xf]
        %v446 = vld [vmem:[#allocation5 + $0x170] sm:$0xf]
        %v447 = vld [vmem:[#allocation5 + $0x174] sm:$0xf]
        %v448 = vld [vmem:[#allocation5 + $0x178] sm:$0xf]
        %v449 = vld [vmem:[#allocation5 + $0x17c] sm:$0xf]
        %v450 = vld [vmem:[#allocation5 + $0x180] sm:$0xf]
        %v451 = vld [vmem:[#allocation5 + $0x184] sm:$0xf]
        %v452 = vld [vmem:[%s2] sm:$0x1]
        %v454 = vlaneseq
        %v455 = vshrl.u32 %v454, 7
        %v456 = vsub.s32 0, %v455
        %v457 = vrot.slane %v452, %v456
        %v557 = vunpack.c.l.b16 %v354
        %v558 = vunpack.c.l.b16 %v355
        %v559 = vunpack.c.l.b16 %v356
        %v560 = vunpack.c.l.b16 %v357
        %v561 = vunpack.c.l.b16 %v358
        %v562 = vunpack.c.l.b16 %v359
        %v563 = vunpack.c.l.b16 %v360
        %v564 = vunpack.c.l.b16 %v361
        %v565 = vunpack.c.l.b16 %v362
        %v566 = vunpack.c.l.b16 %v363
        %v567 = vunpack.c.l.b16 %v364
        %v568 = vunpack.c.l.b16 %v365
        %v569 = vunpack.c.l.b16 %v366
        %v570 = vunpack.c.l.b16 %v367
        %v571 = vunpack.c.l.b16 %v368
        %v572 = vunpack.c.l.b16 %v369
        %v573 = vunpack.c.l.b16 %v370
        %v574 = vunpack.c.l.b16 %v371
        %v575 = vunpack.c.l.b16 %v372
        %v576 = vunpack.c.l.b16 %v373
        %v577 = vunpack.c.l.b16 %v374
        %v578 = vunpack.c.l.b16 %v375
        %v579 = vunpack.c.l.b16 %v376
        %v580 = vunpack.c.l.b16 %v377
        %v581 = vunpack.c.l.b16 %v378
        %v582 = vunpack.c.l.b16 %v379
        %v583 = vunpack.c.l.b16 %v380
        %v584 = vunpack.c.l.b16 %v381
        %v585 = vunpack.c.l.b16 %v382
        %v586 = vunpack.c.l.b16 %v383
        %v587 = vunpack.c.l.b16 %v384
        %v588 = vunpack.c.l.b16 %v385
        %v589 = vunpack.c.l.b16 %v386
        %v590 = vunpack.c.l.b16 %v387
        %v591 = vunpack.c.l.b16 %v388
        %v592 = vunpack.c.l.b16 %v389
        %v593 = vunpack.c.l.b16 %v390
        %v594 = vunpack.c.l.b16 %v391
        %v595 = vunpack.c.l.b16 %v392
        %v596 = vunpack.c.l.b16 %v393
        %v597 = vunpack.c.l.b16 %v394
        %v598 = vunpack.c.l.b16 %v395
        %v599 = vunpack.c.l.b16 %v396
        %v600 = vunpack.c.l.b16 %v397
        %v601 = vunpack.c.l.b16 %v398
        %v602 = vunpack.c.l.b16 %v399
        %v603 = vunpack.c.l.b16 %v400
        %v604 = vunpack.c.l.b16 %v401
        %v605 = vunpack.c.l.b16 %v402
        %v606 = vunpack.c.l.b16 %v403
        %v607 = vunpack.c.l.b16 %v404
        %v608 = vunpack.c.l.b16 %v405
        %v609 = vunpack.c.l.b16 %v406
        %v610 = vunpack.c.l.b16 %v407
        %v611 = vunpack.c.l.b16 %v408
        %v612 = vunpack.c.l.b16 %v409
        %v613 = vunpack.c.l.b16 %v410
        %v614 = vunpack.c.l.b16 %v411
        %v615 = vunpack.c.l.b16 %v412
        %v616 = vunpack.c.l.b16 %v413
        %v617 = vunpack.c.l.b16 %v414
        %v618 = vunpack.c.l.b16 %v415
        %v619 = vunpack.c.l.b16 %v416
        %v620 = vunpack.c.l.b16 %v417
        %v621 = vunpack.c.l.b16 %v418
        %v622 = vunpack.c.l.b16 %v419
        %v623 = vunpack.c.l.b16 %v420
        %v624 = vunpack.c.l.b16 %v421
        %v625 = vunpack.c.l.b16 %v422
        %v626 = vunpack.c.l.b16 %v423
        %v627 = vunpack.c.l.b16 %v424
        %v628 = vunpack.c.l.b16 %v425
        %v629 = vunpack.c.l.b16 %v426
        %v630 = vunpack.c.l.b16 %v427
        %v631 = vunpack.c.l.b16 %v428
        %v632 = vunpack.c.l.b16 %v429
        %v633 = vunpack.c.l.b16 %v430
        %v634 = vunpack.c.l.b16 %v431
        %v635 = vunpack.c.l.b16 %v432
        %v636 = vunpack.c.l.b16 %v433
        %v637 = vunpack.c.l.b16 %v434
        %v638 = vunpack.c.l.b16 %v435
        %v639 = vunpack.c.l.b16 %v436
        %v640 = vunpack.c.l.b16 %v437
        %v641 = vunpack.c.l.b16 %v438
        %v642 = vunpack.c.l.b16 %v439
        %v643 = vunpack.c.l.b16 %v440
        %v644 = vunpack.c.l.b16 %v441
        %v645 = vunpack.c.l.b16 %v442
        %v646 = vunpack.c.l.b16 %v443
        %v647 = vunpack.c.l.b16 %v444
        %v648 = vunpack.c.l.b16 %v445
        %v649 = vunpack.c.l.b16 %v446
        %v650 = vunpack.c.l.b16 %v447
        %v651 = vunpack.c.l.b16 %v448
        %v652 = vunpack.c.l.b16 %v449
        %v653 = vunpack.c.l.b16 %v450
        %v654 = vunpack.c.l.b16 %v451
        %v655 = vpack.c.b16 %v558, %v557
        %v656 = vpack.c.b16 %v560, %v559
        %v657 = vpack.c.b16 %v562, %v561
        %v658 = vpack.c.b16 %v564, %v563
        %v659 = vpack.c.b16 %v566, %v565
        %v660 = vpack.c.b16 %v568, %v567
        %v661 = vpack.c.b16 %v570, %v569
        %v662 = vpack.c.b16 %v572, %v571
        %v663 = vpack.c.b16 %v574, %v573
        %v664 = vpack.c.b16 %v576, %v575
        %v665 = vpack.c.b16 %v578, %v577
        %v666 = vpack.c.b16 %v580, %v579
        %v667 = vpack.c.b16 %v582, %v581
        %v668 = vpack.c.b16 %v584, %v583
        %v669 = vpack.c.b16 %v586, %v585
        %v670 = vpack.c.b16 %v588, %v587
        %v671 = vpack.c.b16 %v590, %v589
        %v672 = vpack.c.b16 %v592, %v591
        %v673 = vpack.c.b16 %v594, %v593
        %v674 = vpack.c.b16 %v596, %v595
        %v675 = vpack.c.b16 %v598, %v597
        %v676 = vpack.c.b16 %v600, %v599
        %v677 = vpack.c.b16 %v602, %v601
        %v678 = vpack.c.b16 %v604, %v603
        %v679 = vpack.c.b16 %v606, %v605
        %v680 = vpack.c.b16 %v608, %v607
        %v681 = vpack.c.b16 %v610, %v609
        %v682 = vpack.c.b16 %v612, %v611
        %v683 = vpack.c.b16 %v614, %v613
        %v684 = vpack.c.b16 %v616, %v615
        %v685 = vpack.c.b16 %v618, %v617
        %v686 = vpack.c.b16 %v620, %v619
        %v687 = vpack.c.b16 %v622, %v621
        %v688 = vpack.c.b16 %v624, %v623
        %v689 = vpack.c.b16 %v626, %v625
        %v690 = vpack.c.b16 %v628, %v627
        %v691 = vpack.c.b16 %v630, %v629
        %v692 = vpack.c.b16 %v632, %v631
        %v693 = vpack.c.b16 %v634, %v633
        %v694 = vpack.c.b16 %v636, %v635
        %v695 = vpack.c.b16 %v638, %v637
        %v696 = vpack.c.b16 %v640, %v639
        %v697 = vpack.c.b16 %v642, %v641
        %v698 = vpack.c.b16 %v644, %v643
        %v699 = vpack.c.b16 %v646, %v645
        %v700 = vpack.c.b16 %v648, %v647
        %v701 = vpack.c.b16 %v650, %v649
        %v702 = vpack.c.b16 %v652, %v651
        %v703 = vpack.c.b16 %v654, %v653
        %vm753 = vcmask 130048
        %v755 = vsel %vm753, %v353, 0
        %757 = vmatprep.subr.bf16.mxu0 0
        %758 = vmatpush1.bf16.msra.mxu0 %v662
        %759 = vmatprep.subr.bf16.mxu0 0
        %760 = vmatpush1.bf16.msra.mxu0 %v661
        %761 = vmatprep.subr.bf16.mxu0 0
        %762 = vmatpush1.bf16.msra.mxu0 %v660
        %763 = vmatprep.subr.bf16.mxu0 0
        %764 = vmatpush1.bf16.msra.mxu0 %v659
        %765 = vmatprep.subr.bf16.mxu0 0
        %766 = vmatpush1.bf16.msra.mxu0 %v658
        %767 = vmatprep.subr.bf16.mxu0 0
        %768 = vmatpush1.bf16.msra.mxu0 %v657
        %769 = vmatprep.subr.bf16.mxu0 0
        %770 = vmatpush1.bf16.msra.mxu0 %v656
        %771 = vmatprep.subr.bf16.mxu0 0
        %772 = vmatpush1.bf16.msra.mxu0 %v655
        %773 = vmatprep.subr.bf16.mxu0 0
        %774 = vmatpush2.bf16.msra.mxu0 %v670
        %775 = vmatprep.subr.bf16.mxu0 0
        %776 = vmatpush2.bf16.msra.mxu0 %v669
        %777 = vmatprep.subr.bf16.mxu0 0
        %778 = vmatpush2.bf16.msra.mxu0 %v668
        %779 = vmatprep.subr.bf16.mxu0 0
        %780 = vmatpush2.bf16.msra.mxu0 %v667
        %781 = vmatprep.subr.bf16.mxu0 0
        %782 = vmatpush2.bf16.msra.mxu0 %v666
        %783 = vmatprep.subr.bf16.mxu0 0
        %784 = vmatpush2.bf16.msra.mxu0 %v665
        %785 = vmatprep.subr.bf16.mxu0 0
        %786 = vmatpush2.bf16.msra.mxu0 %v664
        %787 = vmatprep.subr.bf16.mxu0 0
        %788 = vmatpush2.bf16.msra.mxu0 %v663
        %789 = vmatprep.mubr.bf16.mxu0 %v348
        %790 = vmatmul.mubr.bf16.gmra.mxu0 %v347
        %v791 = vpop.f32.mrf.mxu0
        %v792 = vadd.f32 %v457, %v791
        %v793 = vpop.f32.mrf.mxu0
        %v794 = vpop.f32.mrf.mxu0
        %v795 = vpop.f32.mrf.mxu0
        %796 = vdwg.mxu0
        %797 = vmatprep.subr.bf16.mxu0 0
        %798 = vmatpush1.bf16.msra.mxu0 %v678
        %799 = vmatprep.subr.bf16.mxu0 0
        %800 = vmatpush1.bf16.msra.mxu0 %v677
        %801 = vmatprep.subr.bf16.mxu0 0
        %802 = vmatpush1.bf16.msra.mxu0 %v676
        %803 = vmatprep.subr.bf16.mxu0 0
        %804 = vmatpush1.bf16.msra.mxu0 %v675
        %805 = vmatprep.subr.bf16.mxu0 0
        %806 = vmatpush1.bf16.msra.mxu0 %v674
        %807 = vmatprep.subr.bf16.mxu0 0
        %808 = vmatpush1.bf16.msra.mxu0 %v673
        %809 = vmatprep.subr.bf16.mxu0 0
        %810 = vmatpush1.bf16.msra.mxu0 %v672
        %811 = vmatprep.subr.bf16.mxu0 0
        %812 = vmatpush1.bf16.msra.mxu0 %v671
        %813 = vmatprep.subr.bf16.mxu0 0
        %814 = vmatpush2.bf16.msra.mxu0 %v686
        %815 = vmatprep.subr.bf16.mxu0 0
        %816 = vmatpush2.bf16.msra.mxu0 %v685
        %817 = vmatprep.subr.bf16.mxu0 0
        %818 = vmatpush2.bf16.msra.mxu0 %v684
        %819 = vmatprep.subr.bf16.mxu0 0
        %820 = vmatpush2.bf16.msra.mxu0 %v683
        %821 = vmatprep.subr.bf16.mxu0 0
        %822 = vmatpush2.bf16.msra.mxu0 %v682
        %823 = vmatprep.subr.bf16.mxu0 0
        %824 = vmatpush2.bf16.msra.mxu0 %v681
        %825 = vmatprep.subr.bf16.mxu0 0
        %826 = vmatpush2.bf16.msra.mxu0 %v680
        %827 = vmatprep.subr.bf16.mxu0 0
        %828 = vmatpush2.bf16.msra.mxu0 %v679
        %829 = vmatprep.mubr.bf16.mxu0 %v350
        %830 = vmatmul.mubr.bf16.gmra.mxu0 %v349
        %v831 = vpop.f32.mrf.mxu0
        %v832 = vadd.f32 %v792, %v831
        %v833 = vpop.f32.mrf.mxu0
        %v834 = vpop.f32.mrf.mxu0
        %v835 = vpop.f32.mrf.mxu0
        %836 = vdwg.mxu0
        %837 = vmatprep.subr.bf16.mxu0 0
        %838 = vmatpush1.bf16.msra.mxu0 %v694
        %839 = vmatprep.subr.bf16.mxu0 0
        %840 = vmatpush1.bf16.msra.mxu0 %v693
        %841 = vmatprep.subr.bf16.mxu0 0
        %842 = vmatpush1.bf16.msra.mxu0 %v692
        %843 = vmatprep.subr.bf16.mxu0 0
        %844 = vmatpush1.bf16.msra.mxu0 %v691
        %845 = vmatprep.subr.bf16.mxu0 0
        %846 = vmatpush1.bf16.msra.mxu0 %v690
        %847 = vmatprep.subr.bf16.mxu0 0
        %848 = vmatpush1.bf16.msra.mxu0 %v689
        %849 = vmatprep.subr.bf16.mxu0 0
        %850 = vmatpush1.bf16.msra.mxu0 %v688
        %851 = vmatprep.subr.bf16.mxu0 0
        %852 = vmatpush1.bf16.msra.mxu0 %v687
        %853 = vmatprep.subr.bf16.mxu0 0
        %854 = vmatpush2.bf16.msra.mxu0 %v702
        %855 = vmatprep.subr.bf16.mxu0 0
        %856 = vmatpush2.bf16.msra.mxu0 %v701
        %857 = vmatprep.subr.bf16.mxu0 0
        %858 = vmatpush2.bf16.msra.mxu0 %v700
        %859 = vmatprep.subr.bf16.mxu0 0
        %860 = vmatpush2.bf16.msra.mxu0 %v699
        %861 = vmatprep.subr.bf16.mxu0 0
        %862 = vmatpush2.bf16.msra.mxu0 %v698
        %863 = vmatprep.subr.bf16.mxu0 0
        %864 = vmatpush2.bf16.msra.mxu0 %v697
        %865 = vmatprep.subr.bf16.mxu0 0
        %866 = vmatpush2.bf16.msra.mxu0 %v696
        %867 = vmatprep.subr.bf16.mxu0 0
        %868 = vmatpush2.bf16.msra.mxu0 %v695
        %869 = vmatprep.mubr.bf16.mxu0 %v352
        %870 = vmatmul.mubr.bf16.gmra.mxu0 %v351
        %v871 = vpop.f32.mrf.mxu0
        %v872 = vadd.f32 %v832, %v871
        %v873 = vpop.f32.mrf.mxu0
        %v874 = vpop.f32.mrf.mxu0
        %v875 = vpop.f32.mrf.mxu0
        %876 = vdwg.mxu0
        %877 = vmatprep.subr.bf16.mxu0 0
        %878 = vmatpush1.bf16.msra.mxu0 0
        %879 = vmatprep.subr.bf16.mxu0 0
        %880 = vmatpush1.bf16.msra.mxu0 0
        %881 = vmatprep.subr.bf16.mxu0 0
        %882 = vmatpush1.bf16.msra.mxu0 0
        %883 = vmatprep.subr.bf16.mxu0 0
        %884 = vmatpush1.bf16.msra.mxu0 0
        %885 = vmatprep.subr.bf16.mxu0 0
        %886 = vmatpush1.bf16.msra.mxu0 0
        %887 = vmatprep.subr.bf16.mxu0 0
        %888 = vmatpush1.bf16.msra.mxu0 0
        %889 = vmatprep.subr.bf16.mxu0 0
        %890 = vmatpush1.bf16.msra.mxu0 0
        %891 = vmatprep.subr.bf16.mxu0 0
        %892 = vmatpush1.bf16.msra.mxu0 %v703
        %893 = vmatprep.subr.bf16.mxu0 0
        %894 = vmatpush2.bf16.msra.mxu0 0
        %895 = vmatprep.subr.bf16.mxu0 0
        %896 = vmatpush2.bf16.msra.mxu0 0
        %897 = vmatprep.subr.bf16.mxu0 0
        %898 = vmatpush2.bf16.msra.mxu0 0
        %899 = vmatprep.subr.bf16.mxu0 0
        %900 = vmatpush2.bf16.msra.mxu0 0
        %901 = vmatprep.subr.bf16.mxu0 0
        %902 = vmatpush2.bf16.msra.mxu0 0
        %903 = vmatprep.subr.bf16.mxu0 0
        %904 = vmatpush2.bf16.msra.mxu0 0
        %905 = vmatprep.subr.bf16.mxu0 0
        %906 = vmatpush2.bf16.msra.mxu0 0
        %907 = vmatprep.subr.bf16.mxu0 0
        %908 = vmatpush2.bf16.msra.mxu0 0
        %909 = vmatprep.mubr.bf16.mxu0 0
        %910 = vmatmul.mubr.bf16.gmra.mxu0 %v755
        %v911 = vpop.f32.mrf.mxu0
        %v912 = vadd.f32 %v872, %v911
        %v913 = vpop.f32.mrf.mxu0
        %v914 = vpop.f32.mrf.mxu0
        %v915 = vpop.f32.mrf.mxu0
        %916 = vdwg.mxu0
        %v917 = vmax.f32 %v912, 0.0
        %v918 = vpack.c.bf16 %v917, %v917
        %v919 = vld [vmem:[#allocation7] sm:$0xf]
        %v920 = vld [vmem:[#allocation7 + $0x4] sm:$0xf]
        %v921 = vld [vmem:[#allocation7 + $0x8] sm:$0xf]
        %v922 = vld [vmem:[#allocation7 + $0xc] sm:$0xf]
        %v923 = vld [vmem:[#allocation7 + $0x10] sm:$0xf]
        %v924 = vld [vmem:[#allocation7 + $0x14] sm:$0xf]
        %v925 = vld [vmem:[#allocation7 + $0x18] sm:$0xf]
        %v926 = vld [vmem:[#allocation7 + $0x1c] sm:$0xf]
        %v927 = vld [vmem:[#allocation7 + $0x20] sm:$0xf]
        %v928 = vld [vmem:[#allocation7 + $0x24] sm:$0xf]
        %v929 = vld [vmem:[#allocation7 + $0x28] sm:$0xf]
        %v930 = vld [vmem:[#allocation7 + $0x2c] sm:$0xf]
        %v931 = vld [vmem:[#allocation7 + $0x30] sm:$0xf]
        %v932 = vld [vmem:[#allocation7 + $0x34] sm:$0xf]
        %v933 = vld [vmem:[#allocation7 + $0x38] sm:$0xf]
        %v934 = vld [vmem:[#allocation7 + $0x3c] sm:$0xf]
        %v935 = vld [vmem:[%s4] sm:$0x1]
        %v937 = vlaneseq
        %v938 = vshrl.u32 %v937, 7
        %v939 = vsub.s32 0, %v938
        %v940 = vrot.slane %v935, %v939
        %v958 = vunpack.c.l.b16 %v919
        %v959 = vunpack.c.l.b16 %v920
        %v960 = vunpack.c.l.b16 %v921
        %v961 = vunpack.c.l.b16 %v922
        %v962 = vunpack.c.l.b16 %v923
        %v963 = vunpack.c.l.b16 %v924
        %v964 = vunpack.c.l.b16 %v925
        %v965 = vunpack.c.l.b16 %v926
        %v966 = vunpack.c.l.b16 %v927
        %v967 = vunpack.c.l.b16 %v928
        %v968 = vunpack.c.l.b16 %v929
        %v969 = vunpack.c.l.b16 %v930
        %v970 = vunpack.c.l.b16 %v931
        %v971 = vunpack.c.l.b16 %v932
        %v972 = vunpack.c.l.b16 %v933
        %v973 = vunpack.c.l.b16 %v934
        %v974 = vpack.c.b16 %v959, %v958
        %v975 = vpack.c.b16 %v961, %v960
        %v976 = vpack.c.b16 %v963, %v962
        %v977 = vpack.c.b16 %v965, %v964
        %v978 = vpack.c.b16 %v967, %v966
        %v979 = vpack.c.b16 %v969, %v968
        %v980 = vpack.c.b16 %v971, %v970
        %v981 = vpack.c.b16 %v973, %v972
        %990 = vmatprep.subr.bf16.mxu0 0
        %991 = vmatpush1.bf16.msra.mxu0 %v981
        %992 = vmatprep.subr.bf16.mxu0 0
        %993 = vmatpush1.bf16.msra.mxu0 %v980
        %994 = vmatprep.subr.bf16.mxu0 0
        %995 = vmatpush1.bf16.msra.mxu0 %v979
        %996 = vmatprep.subr.bf16.mxu0 0
        %997 = vmatpush1.bf16.msra.mxu0 %v978
        %998 = vmatprep.subr.bf16.mxu0 0
        %999 = vmatpush1.bf16.msra.mxu0 %v977
        %1000 = vmatprep.subr.bf16.mxu0 0
        %1001 = vmatpush1.bf16.msra.mxu0 %v976
        %1002 = vmatprep.subr.bf16.mxu0 0
        %1003 = vmatpush1.bf16.msra.mxu0 %v975
        %1004 = vmatprep.subr.bf16.mxu0 0
        %1005 = vmatpush1.bf16.msra.mxu0 %v974
        %1006 = vmatprep.subr.bf16.mxu0 0
        %1007 = vmatpush2.bf16.msra.mxu0 0
        %1008 = vmatprep.subr.bf16.mxu0 0
        %1009 = vmatpush2.bf16.msra.mxu0 0
        %1010 = vmatprep.subr.bf16.mxu0 0
        %1011 = vmatpush2.bf16.msra.mxu0 0
        %1012 = vmatprep.subr.bf16.mxu0 0
        %1013 = vmatpush2.bf16.msra.mxu0 0
        %1014 = vmatprep.subr.bf16.mxu0 0
        %1015 = vmatpush2.bf16.msra.mxu0 0
        %1016 = vmatprep.subr.bf16.mxu0 0
        %1017 = vmatpush2.bf16.msra.mxu0 0
        %1018 = vmatprep.subr.bf16.mxu0 0
        %1019 = vmatpush2.bf16.msra.mxu0 0
        %1020 = vmatprep.subr.bf16.mxu0 0
        %1021 = vmatpush2.bf16.msra.mxu0 0
        %1022 = vmatprep.mubr.bf16.mxu0 0
        %1023 = vmatmul.mubr.bf16.gmra.mxu0 %v918
        %v1024 = vpop.f32.mrf.mxu0
        %v1025 = vadd.f32 %v940, %v1024
        %v1026 = vpop.f32.mrf.mxu0
        %v1027 = vpop.f32.mrf.mxu0
        %v1028 = vpop.f32.mrf.mxu0
        %1029 = vdwg.mxu0
        %v1030 = vmax.f32 %v1025, 0.0
        %v1031 = vpack.c.bf16 %v1030, %v1030
        %v1032 = vld [vmem:[#allocation8] sm:$0xf]
        %v1033 = vld [vmem:[#allocation8 + $0x4] sm:$0xf]
        %v1034 = vld [vmem:[#allocation8 + $0x8] sm:$0xf]
        %v1035 = vld [vmem:[#allocation8 + $0xc] sm:$0xf]
        %v1036 = vld [vmem:[#allocation8 + $0x10] sm:$0xf]
        %v1037 = vld [vmem:[#allocation8 + $0x14] sm:$0xf]
        %v1038 = vld [vmem:[#allocation8 + $0x18] sm:$0xf]
        %v1039 = vld [vmem:[#allocation8 + $0x1c] sm:$0xf]
        %v1040 = vld [vmem:[#allocation8 + $0x20] sm:$0xf]
        %v1041 = vld [vmem:[#allocation8 + $0x24] sm:$0xf]
        %v1042 = vld [vmem:[#allocation8 + $0x28] sm:$0xf]
        %v1043 = vld [vmem:[#allocation8 + $0x2c] sm:$0xf]
        %v1044 = vld [vmem:[#allocation8 + $0x30] sm:$0xf]
        %v1045 = vld [vmem:[#allocation8 + $0x34] sm:$0xf]
        %v1046 = vld [vmem:[#allocation8 + $0x38] sm:$0xf]
        %v1047 = vld [vmem:[#allocation8 + $0x3c] sm:$0xf]
        %v1048 = vld [vmem:[%s6] sm:$0x1]
        %v1050 = vlaneseq
        %v1051 = vshrl.u32 %v1050, 7
        %v1052 = vsub.s32 0, %v1051
        %v1053 = vrot.slane %v1048, %v1052
        %v1071 = vunpack.c.l.b16 %v1032
        %v1072 = vunpack.c.l.b16 %v1033
        %v1073 = vunpack.c.l.b16 %v1034
        %v1074 = vunpack.c.l.b16 %v1035
        %v1075 = vunpack.c.l.b16 %v1036
        %v1076 = vunpack.c.l.b16 %v1037
        %v1077 = vunpack.c.l.b16 %v1038
        %v1078 = vunpack.c.l.b16 %v1039
        %v1079 = vunpack.c.l.b16 %v1040
        %v1080 = vunpack.c.l.b16 %v1041
        %v1081 = vunpack.c.l.b16 %v1042
        %v1082 = vunpack.c.l.b16 %v1043
        %v1083 = vunpack.c.l.b16 %v1044
        %v1084 = vunpack.c.l.b16 %v1045
        %v1085 = vunpack.c.l.b16 %v1046
        %v1086 = vunpack.c.l.b16 %v1047
        %v1087 = vpack.c.b16 %v1072, %v1071
        %v1088 = vpack.c.b16 %v1074, %v1073
        %v1089 = vpack.c.b16 %v1076, %v1075
        %v1090 = vpack.c.b16 %v1078, %v1077
        %v1091 = vpack.c.b16 %v1080, %v1079
        %v1092 = vpack.c.b16 %v1082, %v1081
        %v1093 = vpack.c.b16 %v1084, %v1083
        %v1094 = vpack.c.b16 %v1086, %v1085
        %1103 = vmatprep.subr.bf16.mxu0 0
        %1104 = vmatpush1.bf16.msra.mxu0 %v1094
        %1105 = vmatprep.subr.bf16.mxu0 0
        %1106 = vmatpush1.bf16.msra.mxu0 %v1093
        %1107 = vmatprep.subr.bf16.mxu0 0
        %1108 = vmatpush1.bf16.msra.mxu0 %v1092
        %1109 = vmatprep.subr.bf16.mxu0 0
        %1110 = vmatpush1.bf16.msra.mxu0 %v1091
        %1111 = vmatprep.subr.bf16.mxu0 0
        %1112 = vmatpush1.bf16.msra.mxu0 %v1090
        %1113 = vmatprep.subr.bf16.mxu0 0
        %1114 = vmatpush1.bf16.msra.mxu0 %v1089
        %1115 = vmatprep.subr.bf16.mxu0 0
        %1116 = vmatpush1.bf16.msra.mxu0 %v1088
        %1117 = vmatprep.subr.bf16.mxu0 0
        %1118 = vmatpush1.bf16.msra.mxu0 %v1087
        %1119 = vmatprep.subr.bf16.mxu0 0
        %1120 = vmatpush2.bf16.msra.mxu0 0
        %1121 = vmatprep.subr.bf16.mxu0 0
        %1122 = vmatpush2.bf16.msra.mxu0 0
        %1123 = vmatprep.subr.bf16.mxu0 0
        %1124 = vmatpush2.bf16.msra.mxu0 0
        %1125 = vmatprep.subr.bf16.mxu0 0
        %1126 = vmatpush2.bf16.msra.mxu0 0
        %1127 = vmatprep.subr.bf16.mxu0 0
        %1128 = vmatpush2.bf16.msra.mxu0 0
        %1129 = vmatprep.subr.bf16.mxu0 0
        %1130 = vmatpush2.bf16.msra.mxu0 0
        %1131 = vmatprep.subr.bf16.mxu0 0
        %1132 = vmatpush2.bf16.msra.mxu0 0
        %1133 = vmatprep.subr.bf16.mxu0 0
        %1134 = vmatpush2.bf16.msra.mxu0 0
        %1135 = vmatprep.mubr.bf16.mxu0 0
        %1136 = vmatmul.mubr.bf16.gmra.mxu0 %v1031
        %v1137 = vpop.f32.mrf.mxu0
        %v1138 = vadd.f32 %v1053, %v1137
        %v1139 = vpop.f32.mrf.mxu0
        %v1140 = vpop.f32.mrf.mxu0
        %v1141 = vpop.f32.mrf.mxu0
        %1142 = vdwg.mxu0
        %1143 = vmax.xlane.f32.xlu0 %v1138
        %v1144 = vpop.xlane.xlu0 %1143
        %v1145 = vsub.f32 %v1138, %v1144
        %v1146 = vmul.f32 %v1145, 1.442695
        %v1147 = vpow.pop %v1146
        %1148 = vadd.xlane.f32.xlu0 %v1147
        %v1149 = vpop.xlane.xlu0 %1148
        %v1150 = vrcp.pop %v1149
        %v1151 = vmul.f32 %v1147, %v1150
        %1152 = vst [vmem:[%s338] sm:$0xff] %v1151
        %s1153 = sand.u32 %s186, 1
        %s1154 = scalar_lea.sflag [#allocation4], %s1153
        %s1155 = sand.u32 %s186, 1
        %s1156 = smul.addr %s1155, 8
        %s1157 = scalar_lea.vmem [#allocation10], %s1156
        // Predicated region
        $region65: #{tpu_custom_call.1} parent=47 // pred_check
          %p1158 = pneg %p196
        $region66: #{tpu_custom_call.1} parent=47 // pred_check_branch
          %1160 = sbr.rel (%p1158) target = $region68
        $region67: #{tpu_custom_call.1} parent=47 // pred_region
          %s1162 = ssub.s32 128, 128
          %1163 = vsyncadd %s1154, %s1162
          %s1164 = smul.addr %s26, 128
          %s1165 = scalar_lea.hbm %s7, %s1164
          %s1167 = sshll.u32 %s1157, 4
          %s1168 = int_to_ptr.vmem [resolvable:$true] %s1167
          %1170 = dma.vmem_to_hbm [thread:$0]  %s1168, 128, %s1165, %s1154
        $region68: #{tpu_custom_call.1} parent=47 // pred_fallthru
          _
      $region48: #{tpu_custom_call.1} parent=5 // pred_fallthru
        _
      %p1171 = scmp.le.s32.totalorder 2, %s21
      // Predicated region
      $region69: #{tpu_custom_call.1} parent=5 // pred_check
        %p1172 = pneg %p1171
      $region70: #{tpu_custom_call.1} parent=5 // pred_check_branch
        %1174 = sbr.rel (%p1172) target = $region72
      $region71: #{tpu_custom_call.1} parent=5 // pred_region
        %s1175 = ssub.s32 %s21, 2
        // Predicated region
        $region73: #{tpu_custom_call.1} parent=71 // pred_check
          %p1176 = pneg %p202
        $region74: #{tpu_custom_call.1} parent=71 // pred_check_branch
          %1178 = sbr.rel (%p1176) target = $region76
        $region75: #{tpu_custom_call.1} parent=71 // pred_region
          %s1179 = sand.u32 %s187, 1
          %s1180 = scalar_lea.sflag [#allocation4], %s1179
          %s1181 = sand.u32 %s187, 1
          %s1182 = smul.addr %s1181, 8
          %s1183 = scalar_lea.vmem [#allocation10], %s1182
          %1184 = dma.done %s1180, 128
        $region76: #{tpu_custom_call.1} parent=71 // pred_fallthru
          _
      $region72: #{tpu_custom_call.1} parent=5 // pred_fallthru
        _
    $region6: #{tpu_custom_call.1} parent=1 // loop_footer
      %s25 = sadd.s32 1, %s21
    $region7: #{tpu_custom_call.1} parent=1 // loop_footer_branch
      %20 = sbr.rel target = $region3
    $region8: #{tpu_custom_call.1} parent=1 // loop_exit
      _
    %1185 = vsyncpa [#allocation3], 1
    %s1186 = scalar_lea.sflag [#allocation3], 1
    %1187 = vsyncpa %s1186, 1
    %1188 = vsyncpa [#allocation6], 1
    %1189 = vsyncpa [#allocation9], 1
    %1190 = vsyncpa [#allocation4], 1
    %s1191 = scalar_lea.sflag [#allocation4], 1
    %1192 = vsyncpa %s1191, 1

</llo_original>
